<compile_context>
chip_gen: v7x
topology: tpu7x:2x2x1
jax: 0.10.0
libtpu: 0.0.40
codegen_flags: <defaults>
</compile_context>

<pallas_src>
import math
import functools

import jax
import jax.numpy as jnp
import numpy as np
from jax.experimental import pallas as pl
from jax.experimental.pallas import tpu as pltpu


MAX_SEQUENCE_LENGTH = 64   # stand-in for utils.MAX_SEQUENCE_LENGTH (kept small)


def make_positional_encoding(max_len: int, d_model: int, dtype=jnp.float32):
    """Deterministic sinusoidal table, identical to the PyTorch __init__."""
    position = jnp.arange(0, max_len, dtype=jnp.float32)[:, None]            # (L, 1)
    div_term = jnp.exp(
        jnp.arange(0, d_model, 2, dtype=jnp.float32) * (-math.log(10000.0) / d_model)
    )                                                                         # (D/2,)
    angles = position * div_term                                              # (L, D/2)
    pe = jnp.zeros((max_len, d_model), jnp.float32)
    pe = pe.at[:, 0::2].set(jnp.sin(angles))
    pe = pe.at[:, 1::2].set(jnp.cos(angles))
    # PyTorch stores pe as (max_len, 1, d_model).
    return pe[:, None, :].astype(dtype)                                       # (L, 1, D)


# ----------------------------- kernels ------------------------------------- #

def _pe_eval_kernel(x_ref, pe_ref, o_ref, *, batch):
    # x_ref : (ts, B*D)   pe_ref : (ts, D)
    pe_b = jnp.tile(pe_ref[...], (1, batch))            # (ts, D) -> (ts, B*D)
    o_ref[...] = (x_ref[...] + pe_b).astype(o_ref.dtype)


def _pe_dropout_kernel(x_ref, pe_ref, bits_ref, o_ref, *, batch, threshold, inv_keep):
    # Inverted dropout: keep with prob (1-p), scale kept values by 1/(1-p).
    pe_b = jnp.tile(pe_ref[...], (1, batch))
    y = x_ref[...] + pe_b
    keep = bits_ref[...] >= jnp.uint32(threshold)        # P(keep) = 1 - p
    o_ref[...] = jnp.where(keep, y * inv_keep, jnp.zeros_like(y)).astype(o_ref.dtype)


# ----------------------------- wrapper -------------------------------------- #

def _row_tile(n_rows, row_bytes, max_rows=None, target_bytes=1 << 20):
    """Pick a row-tile of ~target_bytes; multiple of 8 rows unless full."""
    ts = max(1, target_bytes // max(row_bytes, 1))
    if max_rows is not None:
        ts = min(ts, max_rows)
    if ts >= n_rows:
        return n_rows                                   # full extent: always legal
    ts = max(8, (ts // 8) * 8)                          # sublane multiple
    return min(ts, n_rows)


def positional_encoding_forward(x, pe, *, dropout_p: float = 0.1,
                                training: bool = False, rng_key=None,
                                max_rows_per_block=None):
    """x: (S, B, D); pe: (max_len, 1, D).  Returns dropout(x + pe[:S])."""
    S, B, D = x.shape
    C = B * D

    pe_rows = pe[:S, 0, :].astype(x.dtype)              # (S, D) -- compact table
    x2 = x.reshape(S, C)                                # free (contiguous) reshape

    ts = _row_tile(S, C * x.dtype.itemsize, max_rows_per_block)
    grid = (pl.cdiv(S, ts),)

    row_spec = pl.BlockSpec((ts, C), lambda i: (i, 0))   # lane-dense x / out / bits
    pe_spec = pl.BlockSpec((ts, D), lambda i: (i, 0))    # compact pe rows

    apply_dropout = training and dropout_p > 0.0
    if apply_dropout:
        if rng_key is None:
            rng_key = jax.random.PRNGKey(0)
        bits = jax.random.bits(rng_key, (S, C), dtype=jnp.uint32)
        threshold = min(int(round(dropout_p * 2.0 ** 32)), 2 ** 32 - 1)
        kernel = functools.partial(_pe_dropout_kernel, batch=B,
                                   threshold=threshold,
                                   inv_keep=1.0 / (1.0 - dropout_p))
        in_specs = [row_spec, pe_spec, row_spec]
        args = (x2, pe_rows, bits)
    else:
        kernel = functools.partial(_pe_eval_kernel, batch=B)
        in_specs = [row_spec, pe_spec]
        args = (x2, pe_rows)

    out2 = pl.pallas_call(
        kernel,
        out_shape=jax.ShapeDtypeStruct((S, C), x.dtype),
        grid_spec=pltpu.PrefetchScalarGridSpec(
            num_scalar_prefetch=0,
            grid=grid,
            in_specs=in_specs,
            out_specs=row_spec,
        ),
        compiler_params=pltpu.CompilerParams(
            dimension_semantics=("parallel",),
            vmem_limit_bytes=32 * 1024 * 1024,
        ),
    )(*args)

    return out2.reshape(S, B, D)


# ----------------------------- test ----------------------------------------- #

if __name__ == "__main__":
    d_model = 32
    seq_len = 8
    batch = 2
    dropout_p = 0.1

    key = jax.random.PRNGKey(0)
    kx, kx2 = jax.random.split(key)
    x = jax.random.normal(kx, (seq_len, batch, d_model), dtype=jnp.float32)
    pe = make_positional_encoding(MAX_SEQUENCE_LENGTH, d_model)

    # --- eval-mode forward (dropout = identity), matches torch .eval() ---
    out = jax.block_until_ready(
        positional_encoding_forward(x, pe, dropout_p=dropout_p, training=False))
    ref = x + pe[:seq_len]
    np.testing.assert_allclose(np.asarray(out), np.asarray(ref), rtol=1e-6, atol=1e-6)

    # --- training-mode forward: reproduce the exact mask in plain JAX ---
    key_drop = jax.random.PRNGKey(123)
    out_tr = jax.block_until_ready(
        positional_encoding_forward(x, pe, dropout_p=dropout_p, training=True,
                                    rng_key=key_drop))
    bits = jax.random.bits(key_drop, (seq_len, batch * d_model), dtype=jnp.uint32)
    thr = min(int(round(dropout_p * 2.0 ** 32)), 2 ** 32 - 1)
    keep = (bits >= jnp.uint32(thr)).reshape(seq_len, batch, d_model)
    ref_tr = jnp.where(keep, (x + pe[:seq_len]) * (1.0 / (1.0 - dropout_p)), 0.0)
    np.testing.assert_allclose(np.asarray(out_tr), np.asarray(ref_tr),
                               rtol=1e-6, atol=1e-6)

    # --- second, slightly larger shape to exercise a multi-step parallel grid ---
    d_model2, seq_len2, batch2 = 128, 64, 4
    x_big = jax.random.normal(kx2, (seq_len2, batch2, d_model2), dtype=jnp.float32)
    pe_big = make_positional_encoding(MAX_SEQUENCE_LENGTH, d_model2)
    out_big = jax.block_until_ready(
        positional_encoding_forward(x_big, pe_big, dropout_p=dropout_p,
                                    training=False, max_rows_per_block=16))
    ref_big = x_big + pe_big[:seq_len2]
    np.testing.assert_allclose(np.asarray(out_big), np.asarray(ref_big),
                               rtol=1e-6, atol=1e-6)

    print("KERNEL_OK")
</pallas_src>

<mosaic_0001>
module attributes {stable_mosaic.version = 11 : i64} {
  func.func @_pe_eval_kernel(%arg0: i32, %arg1: memref<8x64xf32, #tpu.memory_space<vmem>>, %arg2: memref<8x32xf32, #tpu.memory_space<vmem>>, %arg3: memref<8x64xf32, #tpu.memory_space<vmem>>) attributes {dimension_semantics = [#tpu.dimension_semantics<parallel>], iteration_bounds = array<i64: 1>, scalar_prefetch = 0 : i64, scratch_operands = 0 : i64, tpu.core_type = #tpu.core_type<tc>, window_params = [{transform_indices = @transform_0, window_bounds = array<i64: 8, 64>}, {transform_indices = @transform_1, window_bounds = array<i64: 8, 32>}, {transform_indices = @transform_2, window_bounds = array<i64: 8, 64>}]} {
    %c0 = arith.constant 0 : index
    %c0_0 = arith.constant 0 : index
    %0 = vector.load %arg2[%c0, %c0_0] : memref<8x32xf32, #tpu.memory_space<vmem>>, vector<8x32xf32>
    %1 = tpu.concatenate %0, %0 in 1 : vector<8x32xf32>, vector<8x32xf32> -> vector<8x64xf32>
    %c0_1 = arith.constant 0 : index
    %c0_2 = arith.constant 0 : index
    %2 = vector.load %arg1[%c0_1, %c0_2] : memref<8x64xf32, #tpu.memory_space<vmem>>, vector<8x64xf32>
    %3 = arith.addf %2, %1 : vector<8x64xf32>
    %c0_3 = arith.constant 0 : index
    %c0_4 = arith.constant 0 : index
    %4 = vector.load %arg3[%c0_3, %c0_4] : memref<8x64xf32, #tpu.memory_space<vmem>>, vector<8x64xf32>
    tpu.vector_store %arg3[%c0_3, %c0_4], %3 {strides = array<i32>} : memref<8x64xf32, #tpu.memory_space<vmem>>, vector<8x64xf32>,
    return
  }
  func.func @transform_0(%arg0: i32) -> (i32, i32) {
    %c0_i32 = arith.constant 0 : i32
    %c0_i32_0 = arith.constant 0 : i32
    return %arg0, %c0_i32 : i32, i32
  }
  func.func @transform_1(%arg0: i32) -> (i32, i32) {
    %c0_i32 = arith.constant 0 : i32
    %c0_i32_0 = arith.constant 0 : i32
    return %arg0, %c0_i32 : i32, i32
  }
  func.func @transform_2(%arg0: i32) -> (i32, i32) {
    %c0_i32 = arith.constant 0 : i32
    %c0_i32_0 = arith.constant 0 : i32
    return %arg0, %c0_i32 : i32, i32
  }
}

</mosaic_0001>

<llo_original>
// kernel: tpu_custom_call.1
$region0: #{tpu_custom_call.1}
  #allocation0 [shape = 'u32[]', space=smem, size = 0x4, offset = 0x4, fixed_abs, tag = 'smem constant byte address 0x4 - core index']
  #allocation1 [shape = 'u32[144,128]{1,0:T(1,128)}', space=vmem, size = 0x12000, scoped, tag = 'internal scratch']
  %s0 = inlined_call_operand.hbm [shape: f32[8,64], index: 0, kind: input, shape index: {}]
  %s1 = inlined_call_operand.hbm [shape: f32[8,32], index: 1, kind: input, shape index: {}]
  %s2 = inlined_call_operand.hbm [shape: f32[8,64], index: 2, kind: output, shape index: {}]
  %s3 = sld [smem:[#allocation0]]
  $region26: #{tpu_custom_call.1} parent=0
    _
  %s5 = ssub.s32 1, %s3
  %s6 = scalar_select 0, %s5, %s3
  $region1: #{tpu_custom_call.1} parent=0
    #allocation2 [shape = 'u8[4096]{0}', space=vmem, size = 0x1000, scoped, tag = 'input window, operand 0, single buffered']
    #allocation3 [shape = 's32[1]{0}', space=sflag, size = 0x4, scoped, tag = 'scoped memory for tpu_custom_call.1']
    #allocation4 [shape = 's32[1]{0}', space=sflag, size = 0x4, scoped, tag = 'scoped memory for tpu_custom_call.1']
    #allocation5 [shape = 'u8[4096]{0}', space=vmem, size = 0x1000, scoped, tag = 'input window, operand 1, single buffered']
    #allocation6 [shape = 's32[1]{0}', space=sflag, size = 0x4, scoped, tag = 'scoped memory for tpu_custom_call.1']
    #allocation7 [shape = 'u8[4096]{0}', space=vmem, size = 0x1000, scoped, tag = 'output window, operand 0, single buffered']
    %7 = vsyncpa [#allocation3], 0
    %8 = vsyncpa [#allocation6], 0
    %9 = vsyncpa [#allocation4], 0
    // Predicated region
    $region2: #{tpu_custom_call.1} parent=1 // pred_check
      _
    $region3: #{tpu_custom_call.1} parent=1 // pred_check_branch
      %11 = sbr.rel (0) target = $region5
    $region4: #{tpu_custom_call.1} parent=1 // pred_region
      %s13 = ssub.s32 128, 128
      %14 = vsyncadd [#allocation3], %s13
      %s16 = sshll.u32 [#allocation2], 4
      %s17 = int_to_ptr.vmem [resolvable:$true] %s16
      %19 = dma.hbm_to_vmem [thread:$0]  %s0, 128, %s17, [#allocation3]
    $region5: #{tpu_custom_call.1} parent=1 // pred_fallthru
      _
    // Predicated region
    $region6: #{tpu_custom_call.1} parent=1 // pred_check
      _
    $region7: #{tpu_custom_call.1} parent=1 // pred_check_branch
      %21 = sbr.rel (0) target = $region9
    $region8: #{tpu_custom_call.1} parent=1 // pred_region
      %s23 = ssub.s32 128, 128
      %24 = vsyncadd [#allocation6], %s23
      %s26 = sshll.u32 [#allocation5], 4
      %s27 = int_to_ptr.vmem [resolvable:$true] %s26
      %29 = dma.hbm_to_vmem [thread:$0]  %s1, 128, %s27, [#allocation6]
    $region9: #{tpu_custom_call.1} parent=1 // pred_fallthru
      _
    // Predicated region
    $region10: #{tpu_custom_call.1} parent=1 // pred_check
      _
    $region11: #{tpu_custom_call.1} parent=1 // pred_check_branch
      %31 = sbr.rel (0) target = $region13
    $region12: #{tpu_custom_call.1} parent=1 // pred_region
      %32 = dma.done [#allocation3], 128
    $region13: #{tpu_custom_call.1} parent=1 // pred_fallthru
      _
    // Predicated region
    $region14: #{tpu_custom_call.1} parent=1 // pred_check
      _
    $region15: #{tpu_custom_call.1} parent=1 // pred_check_branch
      %34 = sbr.rel (0) target = $region17
    $region16: #{tpu_custom_call.1} parent=1 // pred_region
      %35 = dma.done [#allocation6], 128
    $region17: #{tpu_custom_call.1} parent=1 // pred_fallthru
      _
    %v36 = vld [vmem:[#allocation5] sm:$0xff]
    %38 = vrot.lane.b32.xlu0 %v36, 32
    %v39 = vpop.permute.xlu0 %38
    %vm41 = vcmask 261120
    %v42 = vsel %vm41, %v36, %v39
    %v43 = vld [vmem:[#allocation2] sm:$0xff]
    %v44 = vadd.f32 %v43, %v42
    %vm45 = vcmask 523264
    %46 = vst.msk [vmem:[#allocation7] sm:$0xff] %vm45, %v44
    // Predicated region
    $region18: #{tpu_custom_call.1} parent=1 // pred_check
      _
    $region19: #{tpu_custom_call.1} parent=1 // pred_check_branch
      %48 = sbr.rel (0) target = $region21
    $region20: #{tpu_custom_call.1} parent=1 // pred_region
      %s50 = ssub.s32 128, 128
      %51 = vsyncadd [#allocation4], %s50
      %s53 = sshll.u32 [#allocation7], 4
      %s54 = int_to_ptr.vmem [resolvable:$true] %s53
      %56 = dma.vmem_to_hbm [thread:$0]  %s54, 128, %s2, [#allocation4]
    $region21: #{tpu_custom_call.1} parent=1 // pred_fallthru
      _
    // Predicated region
    $region22: #{tpu_custom_call.1} parent=1 // pred_check
      _
    $region23: #{tpu_custom_call.1} parent=1 // pred_check_branch
      %58 = sbr.rel (0) target = $region25
    $region24: #{tpu_custom_call.1} parent=1 // pred_region
      %59 = dma.done [#allocation4], 128
    $region25: #{tpu_custom_call.1} parent=1 // pred_fallthru
      _
    %60 = vsyncpa [#allocation3], 1
    %61 = vsyncpa [#allocation6], 1
    %62 = vsyncpa [#allocation4], 1

</llo_original>
